<compile_context>
chip_gen: v6e
topology: v6e:2x2x1
jax: 0.10.0
libtpu: 0.0.40
codegen_flags: <defaults>
</compile_context>

<pallas_src>
import jax
import jax.numpy as jnp
from jax.experimental import pallas as pl
from jax.experimental.pallas import tpu as pltpu

_LANES = 128                 # vreg lane width; last dim of the lane-dense slab
_SUBLANES = 8                # f32 sublane count; row-padding granularity
_TILE_M = 2048               # rows per grid step -> 2048*128*4 B = 1 MiB/buffer
_PALLAS_MIN_ELEMS = 1 << 16  # below this, a plain fused XLA FMA wins


def _linear_1x1_kernel(w_ref, b_ref, x_ref, o_ref):
    """y = x * w + b  (degenerate 1->1 linear layer).

    w_ref, b_ref : SMEM refs, shape (1,), float32 (resident across grid steps)
    x_ref, o_ref : VMEM refs, shape (tile_m, 128), float32 (one tile)
    """
    o_ref[...] = x_ref[...] * w_ref[0] + b_ref[0]


def _choose_tile_m(rows: int) -> int:
    """Pick a row tile: big enough to amortize per-step overhead, but split
    medium inputs into >= 2 blocks so v7x can place one on each TensorCore and
    the pipeline has a block to overlap."""
    if rows <= 2 * _SUBLANES:
        return rows                               # one tiny block == full array
    if rows <= _TILE_M:
        half = (rows + 1) // 2                    # aim for a 2-block grid
        return ((half + _SUBLANES - 1) // _SUBLANES) * _SUBLANES
    return _TILE_M


def _pallas_fma_2d(x2d, weight, bias):
    """x2d: (rows, 128) float32 -> (rows, 128) float32  via tiled VPU FMA."""
    rows = x2d.shape[0]
    tile_m = _choose_tile_m(rows)
    n = x2d.size
    return pl.pallas_call(
        _linear_1x1_kernel,
        out_shape=jax.ShapeDtypeStruct(x2d.shape, x2d.dtype),
        grid=(pl.cdiv(rows, tile_m),),
        in_specs=[
            pl.BlockSpec(memory_space=pltpu.MemorySpace.SMEM),   # weight (1,)
            pl.BlockSpec(memory_space=pltpu.MemorySpace.SMEM),   # bias   (1,)
            pl.BlockSpec((tile_m, _LANES), lambda i: (i, 0)),    # x tile
        ],
        out_specs=pl.BlockSpec((tile_m, _LANES), lambda i: (i, 0)),
        compiler_params=pltpu.CompilerParams(
            dimension_semantics=("parallel",),    # shard blocks across v7x TCs
        ),
        cost_estimate=pl.CostEstimate(
            flops=2 * n, transcendentals=0, bytes_accessed=8 * n),
    )(weight.reshape(-1), bias.reshape(-1), x2d)


def dummy_tft_forward(x, weight, bias, *, force_pallas=False):
    """x: (B, S, 1) float32 -> (B, S, 1) float32, matching nn.Linear(1, 1)."""
    B, S, F = x.shape
    assert F == 1, "DummyTFT expects last dim == in_features == 1"
    n = B * S

    # Small-input fast path: pallas_call launch overhead dominates tiny FMAs.
    if not force_pallas and n < _PALLAS_MIN_ELEMS:
        return x * weight.reshape(()) + bias.reshape(())

    if n % _LANES == 0:
        # Common case: free reshape to a lane-dense (rows, 128) slab; no pad,
        # no slice -> kernel is the only HBM pass.  The trailing grid block may
        # be partial; the (8,128)-aligned block_shape lets Pallas handle it.
        out2d = _pallas_fma_2d(x.reshape(n // _LANES, _LANES), weight, bias)
        return out2d.reshape(B, S, 1)

    # Ragged N: pad only up to the next 8*128 = 1024 elements (not a whole
    # grid tile).  The pad and the final slice each add one small HBM pass;
    # unavoidable without giving up the lane-dense layout.
    pad_to = _SUBLANES * _LANES
    padded_n = pl.cdiv(n, pad_to) * pad_to
    x_flat = jnp.pad(x.reshape(n), (0, padded_n - n))
    out2d = _pallas_fma_2d(
        x_flat.reshape(padded_n // _LANES, _LANES), weight, bias)
    return out2d.reshape(padded_n)[:n].reshape(B, S, 1)


if __name__ == "__main__":
    key = jax.random.PRNGKey(0)
    k_x, k_x2, k_x3, k_w, k_b = jax.random.split(key, 5)

    # Deterministic parameter init (PyTorch default for Linear(1,1) is
    # U(-1, 1) since fan_in = 1); drawn from fixed PRNG keys here.
    weight = jax.random.uniform(k_w, (1, 1), jnp.float32, minval=-1.0, maxval=1.0)
    bias = jax.random.uniform(k_b, (1,), jnp.float32, minval=-1.0, maxval=1.0)

    fwd = jax.jit(dummy_tft_forward, static_argnames=("force_pallas",))

    # 1) Small shape consistent with the module (batch=2, seq=8, features=1),
    #    forced through the Pallas path (ragged -> minimal 1024-elem pad).
    x_small = jax.random.normal(k_x, (2, 8, 1), jnp.float32)
    y_small = jax.block_until_ready(fwd(x_small, weight, bias, force_pallas=True))
    y_small_ref = x_small @ weight.T + bias
    assert y_small.shape == y_small_ref.shape == (2, 8, 1)
    assert jnp.allclose(y_small, y_small_ref, atol=1e-6), "small-shape mismatch"

    # 2) Lane-aligned medium shape: 131072 elems, N % 128 == 0 -> zero-copy
    #    wrapper path, 2-block grid.
    x_aligned = jax.random.normal(k_x2, (2, 65536, 1), jnp.float32)
    y_aligned = jax.block_until_ready(fwd(x_aligned, weight, bias))
    y_aligned_ref = x_aligned @ weight.T + bias
    assert jnp.allclose(y_aligned, y_aligned_ref, atol=1e-6), "aligned mismatch"

    # 3) Ragged medium shape: 140000 elems -> minimal-pad + slice path and a
    #    partial trailing grid block.
    x_ragged = jax.random.normal(k_x3, (2, 70000, 1), jnp.float32)
    y_ragged = jax.block_until_ready(fwd(x_ragged, weight, bias))
    y_ragged_ref = x_ragged @ weight.T + bias
    assert jnp.allclose(y_ragged, y_ragged_ref, atol=1e-6), "ragged mismatch"

    print("KERNEL_OK")
</pallas_src>

<mosaic_0001>
module attributes {stable_mosaic.version = 11 : i64} {
  func.func @_linear_1x1_kernel(%arg0: i32, %arg1: memref<1xf32, #tpu.memory_space<smem>>, %arg2: memref<1xf32, #tpu.memory_space<smem>>, %arg3: memref<8x128xf32, #tpu.memory_space<vmem>>, %arg4: memref<8x128xf32, #tpu.memory_space<vmem>>) attributes {dimension_semantics = [#tpu.dimension_semantics<parallel>], iteration_bounds = array<i64: 1>, scalar_prefetch = 0 : i64, scratch_operands = 0 : i64, tpu.core_type = #tpu.core_type<tc>, window_params = [{transform_indices = @transform_0, window_bounds = array<i64: 1>}, {transform_indices = @transform_1, window_bounds = array<i64: 1>}, {transform_indices = @transform_2, window_bounds = array<i64: 8, 128>}, {transform_indices = @transform_3, window_bounds = array<i64: 8, 128>}]} {
    %c0 = arith.constant 0 : index
    %c0_0 = arith.constant 0 : index
    %0 = vector.load %arg3[%c0, %c0_0] : memref<8x128xf32, #tpu.memory_space<vmem>>, vector<8x128xf32>
    %c0_1 = arith.constant 0 : index
    %1 = memref.load %arg1[%c0_1] : memref<1xf32, #tpu.memory_space<smem>>
    %2 = vector.broadcast %1 : f32 to vector<8x128xf32>
    %3 = arith.mulf %0, %2 : vector<8x128xf32>
    %c0_2 = arith.constant 0 : index
    %4 = memref.load %arg2[%c0_2] : memref<1xf32, #tpu.memory_space<smem>>
    %5 = vector.broadcast %4 : f32 to vector<8x128xf32>
    %6 = arith.addf %3, %5 : vector<8x128xf32>
    %c0_3 = arith.constant 0 : index
    %c0_4 = arith.constant 0 : index
    %7 = vector.load %arg4[%c0_3, %c0_4] : memref<8x128xf32, #tpu.memory_space<vmem>>, vector<8x128xf32>
    tpu.vector_store %arg4[%c0_3, %c0_4], %6 {strides = array<i32>} : memref<8x128xf32, #tpu.memory_space<vmem>>, vector<8x128xf32>,
    return
  }
  func.func @transform_0(%arg0: i32) -> i32 {
    %c0_i32 = arith.constant 0 : i32
    %c0_i32_0 = arith.constant 0 : i32
    return %c0_i32 : i32
  }
  func.func @transform_1(%arg0: i32) -> i32 {
    %c0_i32 = arith.constant 0 : i32
    %c0_i32_0 = arith.constant 0 : i32
    return %c0_i32 : i32
  }
  func.func @transform_2(%arg0: i32) -> (i32, i32) {
    %c0_i32 = arith.constant 0 : i32
    %c0_i32_0 = arith.constant 0 : i32
    return %arg0, %c0_i32 : i32, i32
  }
  func.func @transform_3(%arg0: i32) -> (i32, i32) {
    %c0_i32 = arith.constant 0 : i32
    %c0_i32_0 = arith.constant 0 : i32
    return %arg0, %c0_i32 : i32, i32
  }
}

</mosaic_0001>

<llo_original>
// kernel: dummy_tft_forward.1
$region0: #{dummy_tft_forward.1}
  #allocation0 [shape = 'u32[]', space=smem, size = 0x4, offset = 0x4, fixed_abs, tag = 'smem constant byte address 0x4 - core index']
  #allocation1 [shape = 'u32[144,128]{1,0:T(1,128)}', space=vmem, size = 0x12000, scoped, tag = 'internal scratch']
  #allocation2 [shape = 'f32[1]{0:T(128)S(6)}', space=smem, size = 0x200, scoped, tag = 'scoped memory for dummy_tft_forward.1']
  #allocation3 [shape = 'f32[1]{0:T(128)S(6)}', space=smem, size = 0x200, scoped, tag = 'scoped memory for dummy_tft_forward.1']
  %s0 = inlined_call_operand.<no memory space> [shape: f32[1], index: 0, kind: input, shape index: {}]
  %s1 = inlined_call_operand.<no memory space> [shape: f32[1], index: 1, kind: input, shape index: {}]
  %s2 = inlined_call_operand.vmem [shape: f32[8,128], index: 2, kind: input, shape index: {}]
  %s3 = inlined_call_operand.vmem [shape: f32[8,128], index: 3, kind: output, shape index: {}]
  %s4 = sld [smem:[#allocation0]]
  $region22: #{dummy_tft_forward.1} parent=0
    _
  %s6 = ssub.s32 1, %s4
  %s7 = scalar_select 0, %s6, %s4
  %8 = sst [smem:[#allocation2]] %s0
  %9 = sst [smem:[#allocation3]] %s1
  // Predicated region
  $region2: #{dummy_tft_forward.1} parent=0 // pred_check
    _
  $region3: #{dummy_tft_forward.1} parent=0 // pred_check_branch
    %11 = sbr.rel (0) target = $region5
  $region4: #{dummy_tft_forward.1} parent=0 // pred_region
    _
  $region5: #{dummy_tft_forward.1} parent=0 // pred_fallthru
    _
  // Predicated region
  $region6: #{dummy_tft_forward.1} parent=0 // pred_check
    _
  $region7: #{dummy_tft_forward.1} parent=0 // pred_check_branch
    %13 = sbr.rel (0) target = $region9
  $region8: #{dummy_tft_forward.1} parent=0 // pred_region
    _
  $region9: #{dummy_tft_forward.1} parent=0 // pred_fallthru
    _
  // Predicated region
  $region10: #{dummy_tft_forward.1} parent=0 // pred_check
    _
  $region11: #{dummy_tft_forward.1} parent=0 // pred_check_branch
    %15 = sbr.rel (0) target = $region13
  $region12: #{dummy_tft_forward.1} parent=0 // pred_region
    _
  $region13: #{dummy_tft_forward.1} parent=0 // pred_fallthru
    _
  %v16 = vld [vmem:[%s2] sm:$0xff]
  %s17 = sld [smem:[#allocation2]]
  %v18 = vstv %s17
  %v19 = vmul.f32 %v16, %v18
  %s20 = sld [smem:[#allocation3]]
  %v21 = vstv %s20
  %v22 = vadd.f32 %v19, %v21
  %23 = vst [vmem:[%s3] sm:$0xff] %v22
  // Predicated region
  $region14: #{dummy_tft_forward.1} parent=0 // pred_check
    _
  $region15: #{dummy_tft_forward.1} parent=0 // pred_check_branch
    %25 = sbr.rel (0) target = $region17
  $region16: #{dummy_tft_forward.1} parent=0 // pred_region
    _
  $region17: #{dummy_tft_forward.1} parent=0 // pred_fallthru
    _
  // Predicated region
  $region18: #{dummy_tft_forward.1} parent=0 // pred_check
    _
  $region19: #{dummy_tft_forward.1} parent=0 // pred_check_branch
    %27 = sbr.rel (0) target = $region21
  $region20: #{dummy_tft_forward.1} parent=0 // pred_region
    _
  $region21: #{dummy_tft_forward.1} parent=0 // pred_fallthru
    _

</llo_original>
